<compile_context>
chip_gen: v6e
topology: v6e:2x2x1
jax: 0.10.0
libtpu: 0.0.40
codegen_flags: <defaults>
</compile_context>

<pallas_src>
import functools

import jax
import jax.numpy as jnp
from jax.experimental import pallas as pl
from jax.experimental.pallas import tpu as pltpu


def _lstm_kernel(x_ref, w_ref, s_ref, out_ref, *, seq_len, batch, feat,
                 hidden_size):
    """Single invocation: full LSTM recurrence + linear head.

    x_ref: (S*B, F)   bf16, time-major (row t*B + b)
    w_ref: (H+F, 4H)  bf16, rows [0:H] = W_hh^T, rows [H:H+F] = W_ih^T
    s_ref: (3, 4H)    f32,  row 0 = b_ih+b_hh, row 1[:H] = linear weight,
                             row 2[0] = linear bias
    out_ref: (B, 1)   f32
    """
    H, B, F = hidden_size, batch, feat

    w_full = w_ref[...]                       # (H+F, 4H) bf16
    whh = w_full[0:H, :]                      # (H, 4H)   bf16
    wih = w_full[H:H + F, :]                  # (F, 4H)   bf16
    b = s_ref[0:1, :]                         # (1, 4H)   f32
    wlin = s_ref[1:2, 0:H]                    # (1, H)    f32
    blin = s_ref[2:3, 0:1]                    # (1, 1)    f32

    # Batched input projection for all timesteps in one MXU call,
    # bias broadcast folded in once (outside the recurrent loop).
    gx = jnp.dot(x_ref[...], wih,
                 preferred_element_type=jnp.float32) + b            # (S*B, 4H)

    # Lane mask selecting the g-gate (tanh) range of the 4H-wide vreg.
    lane = jax.lax.broadcasted_iota(jnp.int32, (B, 4 * H), 1)
    is_g = jnp.logical_and(lane >= 2 * H, lane < 3 * H)

    h = jnp.zeros((B, H), jnp.float32)
    c = jnp.zeros((B, H), jnp.float32)

    # Strictly serial recurrence; statically unrolled (S is small).
    # TODO(synk): for long sequences, stage gx in a pltpu.VMEM scratch and use
    #             lax.fori_loop(..., unroll=True) to keep vreg pressure flat.
    # TODO(synk): pltpu.matmul_push_rhs/acc_lhs/pop could keep W_hh staged in
    #             the MXU weight registers across the loop; skipped here to
    #             keep lowering robust at these tiny, non-tile-aligned shapes.
    for t in range(seq_len):
        gx_t = gx[t * B:(t + 1) * B, :]                              # (B, 4H)
        gates = gx_t + jnp.dot(h.astype(jnp.bfloat16), whh,
                               preferred_element_type=jnp.float32)   # (B, 4H)

        # Single EUP pass for all four gates (PyTorch order i, f, g, o):
        #   sigmoid(x) = 0.5 * tanh(0.5 * x) + 0.5
        pre = jnp.where(is_g, gates, 0.5 * gates)
        tg = jnp.tanh(pre)
        act = jnp.where(is_g, tg, 0.5 * tg + 0.5)

        i_g = act[:, 0 * H:1 * H]
        f_g = act[:, 1 * H:2 * H]
        g_g = act[:, 2 * H:3 * H]
        o_g = act[:, 3 * H:4 * H]

        c = f_g * c + i_g * g_g
        h = o_g * jnp.tanh(c)

    # Linear(H -> 1) on the final hidden state: VPU mul + lane reduction.
    out_ref[...] = jnp.sum(h * wlin, axis=-1, keepdims=True) + blin


def prepare_params(params, *, num_features_per_element, hidden_size):
    """One-time weight prep (do NOT call per forward): transpose, bf16 cast,
    bias fold, and packing into two lane-dense slabs."""
    F, H = num_features_per_element, hidden_size

    whh_t = params["weight_hh"].T.astype(jnp.bfloat16)               # (H, 4H)
    wih_t = params["weight_ih"].T.astype(jnp.bfloat16)               # (F, 4H)
    w_packed = jnp.concatenate([whh_t, wih_t], axis=0)               # (H+F, 4H)

    b = (params["bias_ih"] + params["bias_hh"]).astype(jnp.float32)  # (4H,)
    row_w = jnp.zeros((4 * H,), jnp.float32).at[0:H].set(
        params["linear_weight"].reshape(H).astype(jnp.float32))
    row_b = jnp.zeros((4 * H,), jnp.float32).at[0].set(
        params["linear_bias"].reshape(()).astype(jnp.float32))
    s_packed = jnp.stack([b, row_w, row_b], axis=0)                  # (3, 4H)

    return {"w_packed": w_packed, "s_packed": s_packed}


@functools.partial(
    jax.jit,
    static_argnames=("sequence_length", "num_features_per_element",
                     "hidden_size"))
def sample_lstm_forward(x, prepped, *, sequence_length,
                        num_features_per_element, hidden_size):
    """Mirrors SampleLSTM.forward: returns shape (batch,) float32."""
    B = x.shape[0]
    S, F, H = sequence_length, num_features_per_element, hidden_size

    # forward does x.reshape(batch, seq, feat); lay out time-major so the
    # per-step slices of the precomputed gates are contiguous vreg-aligned
    # views.  Fuses into one tiny op under jit, adjacent to the pallas_call.
    x3 = x.reshape(B, S, F).astype(jnp.float32)
    x_tm = jnp.transpose(x3, (1, 0, 2)).reshape(S * B, F).astype(jnp.bfloat16)

    kernel = functools.partial(_lstm_kernel, seq_len=S, batch=B, feat=F,
                               hidden_size=H)

    out = pl.pallas_call(
        kernel,
        out_shape=jax.ShapeDtypeStruct((B, 1), jnp.float32),
        in_specs=[pl.BlockSpec(memory_space=pltpu.MemorySpace.VMEM)] * 3,
        out_specs=pl.BlockSpec(memory_space=pltpu.MemorySpace.VMEM),
    )(x_tm, prepped["w_packed"], prepped["s_packed"])

    # TODO(synk): only add a "parallel" batch grid axis for v7x's 2 TCs when
    #             the per-core batch shard is large (roughly B >= 256).
    return out.reshape(-1)   # .flatten() -> (batch,)


def _reference_forward(x, params, *, sequence_length, num_features_per_element,
                       hidden_size):
    """Pure-JAX f32 reference for correctness checking."""
    batch = x.shape[0]
    x = x.reshape(batch, sequence_length,
                  num_features_per_element).astype(jnp.float32)
    H = hidden_size
    wih, whh = params["weight_ih"], params["weight_hh"]
    b = params["bias_ih"] + params["bias_hh"]
    h = jnp.zeros((batch, H), jnp.float32)
    c = jnp.zeros((batch, H), jnp.float32)
    for t in range(sequence_length):
        gates = x[:, t, :] @ wih.T + h @ whh.T + b
        i = jax.nn.sigmoid(gates[:, 0 * H:1 * H])
        f = jax.nn.sigmoid(gates[:, 1 * H:2 * H])
        g = jnp.tanh(gates[:, 2 * H:3 * H])
        o = jax.nn.sigmoid(gates[:, 3 * H:4 * H])
        c = f * c + i * g
        h = o * jnp.tanh(c)
    out = h @ params["linear_weight"].T + params["linear_bias"]
    return out.reshape(-1)


def init_params(key, *, input_size, hidden_size):
    """Deterministic init matching PyTorch shapes (uniform +-1/sqrt(H))."""
    k = 1.0 / jnp.sqrt(hidden_size)
    keys = jax.random.split(key, 6)
    u = lambda kk, shape: jax.random.uniform(kk, shape, jnp.float32, -k, k)
    return {
        "weight_ih": u(keys[0], (4 * hidden_size, input_size)),
        "weight_hh": u(keys[1], (4 * hidden_size, hidden_size)),
        "bias_ih": u(keys[2], (4 * hidden_size,)),
        "bias_hh": u(keys[3], (4 * hidden_size,)),
        "linear_weight": u(keys[4], (1, hidden_size)),
        "linear_bias": u(keys[5], (1,)),
    }


if __name__ == "__main__":
    # small shapes consistent with the module
    batch = 8
    sequence_length = 6
    num_features_per_element = 8
    hidden_size = 32

    key = jax.random.PRNGKey(0)
    k_x, k_p = jax.random.split(key)
    params = init_params(k_p, input_size=num_features_per_element,
                         hidden_size=hidden_size)

    # One-time (cached) parameter prep — hoisted out of the forward call.
    prepped = prepare_params(params,
                             num_features_per_element=num_features_per_element,
                             hidden_size=hidden_size)
    prepped = jax.tree_util.tree_map(jax.block_until_ready, prepped)

    # input as it arrives to forward() pre-reshape: (batch, seq * features)
    x = jax.random.normal(
        k_x, (batch, sequence_length * num_features_per_element), jnp.float32)

    out = sample_lstm_forward(
        x, prepped,
        sequence_length=sequence_length,
        num_features_per_element=num_features_per_element,
        hidden_size=hidden_size)
    out = jax.block_until_ready(out)

    ref = _reference_forward(
        x, params,
        sequence_length=sequence_length,
        num_features_per_element=num_features_per_element,
        hidden_size=hidden_size)

    assert out.shape == (batch,)
    # bf16 MXU operands (f32 accumulation) -> small deviation vs pure-f32 ref.
    assert jnp.allclose(out, ref, atol=2e-2, rtol=2e-2)
    print("KERNEL_OK")
</pallas_src>

<mosaic_0001>
module attributes {stable_mosaic.version = 11 : i64} {
  func.func @_lstm_kernel(%arg0: memref<48x8xbf16, #tpu.memory_space<vmem>>, %arg1: memref<40x128xbf16, #tpu.memory_space<vmem>>, %arg2: memref<3x128xf32, #tpu.memory_space<vmem>>, %arg3: memref<8x1xf32, #tpu.memory_space<vmem>>) attributes {dimension_semantics = [], scalar_prefetch = 0 : i64, scratch_operands = 0 : i64, tpu.core_type = #tpu.core_type<tc>} {
    %c0 = arith.constant 0 : index
    %c0_0 = arith.constant 0 : index
    %0 = vector.load %arg1[%c0, %c0_0] : memref<40x128xbf16, #tpu.memory_space<vmem>>, vector<40x128xbf16>
    %1 = vector.extract_strided_slice %0 {offsets = [0, 0], sizes = [32, 128], strides = [1, 1]} : vector<40x128xbf16> to vector<32x128xbf16>
    %2 = vector.extract_strided_slice %0 {offsets = [32, 0], sizes = [8, 128], strides = [1, 1]} : vector<40x128xbf16> to vector<8x128xbf16>
    %c0_1 = arith.constant 0 : index
    %c0_2 = arith.constant 0 : index
    %3 = vector.load %arg2[%c0_1, %c0_2] : memref<3x128xf32, #tpu.memory_space<vmem>>, vector<1x128xf32>
    %c1 = arith.constant 1 : index
    %c0_3 = arith.constant 0 : index
    %4 = vector.load %arg2[%c1, %c0_3] : memref<3x128xf32, #tpu.memory_space<vmem>>, vector<1x32xf32>
    %c2 = arith.constant 2 : index
    %c0_4 = arith.constant 0 : index
    %5 = vector.load %arg2[%c2, %c0_4] : memref<3x128xf32, #tpu.memory_space<vmem>>, vector<1x1xf32>
    %c0_5 = arith.constant 0 : index
    %c0_6 = arith.constant 0 : index
    %6 = vector.load %arg0[%c0_5, %c0_6] : memref<48x8xbf16, #tpu.memory_space<vmem>>, vector<48x8xbf16>
    %cst = arith.constant dense<0.000000e+00> : vector<48x128xf32>
    %7 = tpu.matmul %6, %2, %cst {dimension_numbers = #tpu.dot_dimension_numbers<[1], [0], [0], [1], [0, 0, 1, 1], [], []>} : vector<48x8xbf16>, vector<8x128xbf16>, vector<48x128xf32> -> vector<48x128xf32>
    %8 = vector.broadcast %3 : vector<1x128xf32> to vector<48x128xf32>
    %9 = arith.addf %7, %8 : vector<48x128xf32>
    %10 = tpu.iota {dimensions = array<i32: 1>} : vector<8x128xi32>
    %c64_i32 = arith.constant 64 : i32
    %11 = vector.broadcast %c64_i32 : i32 to vector<8x128xi32>
    %12 = arith.cmpi sge, %10, %11 : vector<8x128xi32>
    %c96_i32 = arith.constant 96 : i32
    %13 = vector.broadcast %c96_i32 : i32 to vector<8x128xi32>
    %14 = arith.cmpi slt, %10, %13 : vector<8x128xi32>
    %15 = arith.andi %12, %14 : vector<8x128xi1>
    %cst_7 = arith.constant 0.000000e+00 : f32
    %16 = vector.broadcast %cst_7 : f32 to vector<8x32xf32>
    %cst_8 = arith.constant 0.000000e+00 : f32
    %17 = vector.broadcast %cst_8 : f32 to vector<8x32xf32>
    %18 = vector.extract_strided_slice %9 {offsets = [0, 0], sizes = [8, 128], strides = [1, 1]} : vector<48x128xf32> to vector<8x128xf32>
    %19 = arith.truncf %16 : vector<8x32xf32> to vector<8x32xbf16>
    %cst_9 = arith.constant dense<0.000000e+00> : vector<8x128xf32>
    %20 = tpu.matmul %19, %1, %cst_9 {dimension_numbers = #tpu.dot_dimension_numbers<[1], [0], [0], [1], [0, 0, 1, 1], [], []>} : vector<8x32xbf16>, vector<32x128xbf16>, vector<8x128xf32> -> vector<8x128xf32>
    %21 = arith.addf %18, %20 : vector<8x128xf32>
    %cst_10 = arith.constant 5.000000e-01 : f32
    %22 = vector.broadcast %cst_10 : f32 to vector<8x128xf32>
    %23 = arith.mulf %22, %21 : vector<8x128xf32>
    %24 = arith.select %15, %21, %23 : vector<8x128xi1>, vector<8x128xf32>
    %25 = math.tanh %24 : vector<8x128xf32>
    %cst_11 = arith.constant 5.000000e-01 : f32
    %26 = vector.broadcast %cst_11 : f32 to vector<8x128xf32>
    %27 = arith.mulf %26, %25 : vector<8x128xf32>
    %cst_12 = arith.constant 5.000000e-01 : f32
    %28 = vector.broadcast %cst_12 : f32 to vector<8x128xf32>
    %29 = arith.addf %27, %28 : vector<8x128xf32>
    %30 = arith.select %15, %25, %29 : vector<8x128xi1>, vector<8x128xf32>
    %31 = vector.extract_strided_slice %30 {offsets = [0, 0], sizes = [8, 32], strides = [1, 1]} : vector<8x128xf32> to vector<8x32xf32>
    %32 = vector.extract_strided_slice %30 {offsets = [0, 32], sizes = [8, 32], strides = [1, 1]} : vector<8x128xf32> to vector<8x32xf32>
    %33 = vector.extract_strided_slice %30 {offsets = [0, 64], sizes = [8, 32], strides = [1, 1]} : vector<8x128xf32> to vector<8x32xf32>
    %34 = vector.extract_strided_slice %30 {offsets = [0, 96], sizes = [8, 32], strides = [1, 1]} : vector<8x128xf32> to vector<8x32xf32>
    %35 = arith.mulf %32, %17 : vector<8x32xf32>
    %36 = arith.mulf %31, %33 : vector<8x32xf32>
    %37 = arith.addf %35, %36 : vector<8x32xf32>
    %38 = math.tanh %37 : vector<8x32xf32>
    %39 = arith.mulf %34, %38 : vector<8x32xf32>
    %40 = vector.extract_strided_slice %9 {offsets = [8, 0], sizes = [8, 128], strides = [1, 1]} : vector<48x128xf32> to vector<8x128xf32>
    %41 = arith.truncf %39 : vector<8x32xf32> to vector<8x32xbf16>
    %cst_13 = arith.constant dense<0.000000e+00> : vector<8x128xf32>
    %42 = tpu.matmul %41, %1, %cst_13 {dimension_numbers = #tpu.dot_dimension_numbers<[1], [0], [0], [1], [0, 0, 1, 1], [], []>} : vector<8x32xbf16>, vector<32x128xbf16>, vector<8x128xf32> -> vector<8x128xf32>
    %43 = arith.addf %40, %42 : vector<8x128xf32>
    %cst_14 = arith.constant 5.000000e-01 : f32
    %44 = vector.broadcast %cst_14 : f32 to vector<8x128xf32>
    %45 = arith.mulf %44, %43 : vector<8x128xf32>
    %46 = arith.select %15, %43, %45 : vector<8x128xi1>, vector<8x128xf32>
    %47 = math.tanh %46 : vector<8x128xf32>
    %cst_15 = arith.constant 5.000000e-01 : f32
    %48 = vector.broadcast %cst_15 : f32 to vector<8x128xf32>
    %49 = arith.mulf %48, %47 : vector<8x128xf32>
    %cst_16 = arith.constant 5.000000e-01 : f32
    %50 = vector.broadcast %cst_16 : f32 to vector<8x128xf32>
    %51 = arith.addf %49, %50 : vector<8x128xf32>
    %52 = arith.select %15, %47, %51 : vector<8x128xi1>, vector<8x128xf32>
    %53 = vector.extract_strided_slice %52 {offsets = [0, 0], sizes = [8, 32], strides = [1, 1]} : vector<8x128xf32> to vector<8x32xf32>
    %54 = vector.extract_strided_slice %52 {offsets = [0, 32], sizes = [8, 32], strides = [1, 1]} : vector<8x128xf32> to vector<8x32xf32>
    %55 = vector.extract_strided_slice %52 {offsets = [0, 64], sizes = [8, 32], strides = [1, 1]} : vector<8x128xf32> to vector<8x32xf32>
    %56 = vector.extract_strided_slice %52 {offsets = [0, 96], sizes = [8, 32], strides = [1, 1]} : vector<8x128xf32> to vector<8x32xf32>
    %57 = arith.mulf %54, %37 : vector<8x32xf32>
    %58 = arith.mulf %53, %55 : vector<8x32xf32>
    %59 = arith.addf %57, %58 : vector<8x32xf32>
    %60 = math.tanh %59 : vector<8x32xf32>
    %61 = arith.mulf %56, %60 : vector<8x32xf32>
    %62 = vector.extract_strided_slice %9 {offsets = [16, 0], sizes = [8, 128], strides = [1, 1]} : vector<48x128xf32> to vector<8x128xf32>
    %63 = arith.truncf %61 : vector<8x32xf32> to vector<8x32xbf16>
    %cst_17 = arith.constant dense<0.000000e+00> : vector<8x128xf32>
    %64 = tpu.matmul %63, %1, %cst_17 {dimension_numbers = #tpu.dot_dimension_numbers<[1], [0], [0], [1], [0, 0, 1, 1], [], []>} : vector<8x32xbf16>, vector<32x128xbf16>, vector<8x128xf32> -> vector<8x128xf32>
    %65 = arith.addf %62, %64 : vector<8x128xf32>
    %cst_18 = arith.constant 5.000000e-01 : f32
    %66 = vector.broadcast %cst_18 : f32 to vector<8x128xf32>
    %67 = arith.mulf %66, %65 : vector<8x128xf32>
    %68 = arith.select %15, %65, %67 : vector<8x128xi1>, vector<8x128xf32>
    %69 = math.tanh %68 : vector<8x128xf32>
    %cst_19 = arith.constant 5.000000e-01 : f32
    %70 = vector.broadcast %cst_19 : f32 to vector<8x128xf32>
    %71 = arith.mulf %70, %69 : vector<8x128xf32>
    %cst_20 = arith.constant 5.000000e-01 : f32
    %72 = vector.broadcast %cst_20 : f32 to vector<8x128xf32>
    %73 = arith.addf %71, %72 : vector<8x128xf32>
    %74 = arith.select %15, %69, %73 : vector<8x128xi1>, vector<8x128xf32>
    %75 = vector.extract_strided_slice %74 {offsets = [0, 0], sizes = [8, 32], strides = [1, 1]} : vector<8x128xf32> to vector<8x32xf32>
    %76 = vector.extract_strided_slice %74 {offsets = [0, 32], sizes = [8, 32], strides = [1, 1]} : vector<8x128xf32> to vector<8x32xf32>
    %77 = vector.extract_strided_slice %74 {offsets = [0, 64], sizes = [8, 32], strides = [1, 1]} : vector<8x128xf32> to vector<8x32xf32>
    %78 = vector.extract_strided_slice %74 {offsets = [0, 96], sizes = [8, 32], strides = [1, 1]} : vector<8x128xf32> to vector<8x32xf32>
    %79 = arith.mulf %76, %59 : vector<8x32xf32>
    %80 = arith.mulf %75, %77 : vector<8x32xf32>
    %81 = arith.addf %79, %80 : vector<8x32xf32>
    %82 = math.tanh %81 : vector<8x32xf32>
    %83 = arith.mulf %78, %82 : vector<8x32xf32>
    %84 = vector.extract_strided_slice %9 {offsets = [24, 0], sizes = [8, 128], strides = [1, 1]} : vector<48x128xf32> to vector<8x128xf32>
    %85 = arith.truncf %83 : vector<8x32xf32> to vector<8x32xbf16>
    %cst_21 = arith.constant dense<0.000000e+00> : vector<8x128xf32>
    %86 = tpu.matmul %85, %1, %cst_21 {dimension_numbers = #tpu.dot_dimension_numbers<[1], [0], [0], [1], [0, 0, 1, 1], [], []>} : vector<8x32xbf16>, vector<32x128xbf16>, vector<8x128xf32> -> vector<8x128xf32>
    %87 = arith.addf %84, %86 : vector<8x128xf32>
    %cst_22 = arith.constant 5.000000e-01 : f32
    %88 = vector.broadcast %cst_22 : f32 to vector<8x128xf32>
    %89 = arith.mulf %88, %87 : vector<8x128xf32>
    %90 = arith.select %15, %87, %89 : vector<8x128xi1>, vector<8x128xf32>
    %91 = math.tanh %90 : vector<8x128xf32>
    %cst_23 = arith.constant 5.000000e-01 : f32
    %92 = vector.broadcast %cst_23 : f32 to vector<8x128xf32>
    %93 = arith.mulf %92, %91 : vector<8x128xf32>
    %cst_24 = arith.constant 5.000000e-01 : f32
    %94 = vector.broadcast %cst_24 : f32 to vector<8x128xf32>
    %95 = arith.addf %93, %94 : vector<8x128xf32>
    %96 = arith.select %15, %91, %95 : vector<8x128xi1>, vector<8x128xf32>
    %97 = vector.extract_strided_slice %96 {offsets = [0, 0], sizes = [8, 32], strides = [1, 1]} : vector<8x128xf32> to vector<8x32xf32>
    %98 = vector.extract_strided_slice %96 {offsets = [0, 32], sizes = [8, 32], strides = [1, 1]} : vector<8x128xf32> to vector<8x32xf32>
    %99 = vector.extract_strided_slice %96 {offsets = [0, 64], sizes = [8, 32], strides = [1, 1]} : vector<8x128xf32> to vector<8x32xf32>
    %100 = vector.extract_strided_slice %96 {offsets = [0, 96], sizes = [8, 32], strides = [1, 1]} : vector<8x128xf32> to vector<8x32xf32>
    %101 = arith.mulf %98, %81 : vector<8x32xf32>
    %102 = arith.mulf %97, %99 : vector<8x32xf32>
    %103 = arith.addf %101, %102 : vector<8x32xf32>
    %104 = math.tanh %103 : vector<8x32xf32>
    %105 = arith.mulf %100, %104 : vector<8x32xf32>
    %106 = vector.extract_strided_slice %9 {offsets = [32, 0], sizes = [8, 128], strides = [1, 1]} : vector<48x128xf32> to vector<8x128xf32>
    %107 = arith.truncf %105 : vector<8x32xf32> to vector<8x32xbf16>
    %cst_25 = arith.constant dense<0.000000e+00> : vector<8x128xf32>
    %108 = tpu.matmul %107, %1, %cst_25 {dimension_numbers = #tpu.dot_dimension_numbers<[1], [0], [0], [1], [0, 0, 1, 1], [], []>} : vector<8x32xbf16>, vector<32x128xbf16>, vector<8x128xf32> -> vector<8x128xf32>
    %109 = arith.addf %106, %108 : vector<8x128xf32>
    %cst_26 = arith.constant 5.000000e-01 : f32
    %110 = vector.broadcast %cst_26 : f32 to vector<8x128xf32>
    %111 = arith.mulf %110, %109 : vector<8x128xf32>
    %112 = arith.select %15, %109, %111 : vector<8x128xi1>, vector<8x128xf32>
    %113 = math.tanh %112 : vector<8x128xf32>
    %cst_27 = arith.constant 5.000000e-01 : f32
    %114 = vector.broadcast %cst_27 : f32 to vector<8x128xf32>
    %115 = arith.mulf %114, %113 : vector<8x128xf32>
    %cst_28 = arith.constant 5.000000e-01 : f32
    %116 = vector.broadcast %cst_28 : f32 to vector<8x128xf32>
    %117 = arith.addf %115, %116 : vector<8x128xf32>
    %118 = arith.select %15, %113, %117 : vector<8x128xi1>, vector<8x128xf32>
    %119 = vector.extract_strided_slice %118 {offsets = [0, 0], sizes = [8, 32], strides = [1, 1]} : vector<8x128xf32> to vector<8x32xf32>
    %120 = vector.extract_strided_slice %118 {offsets = [0, 32], sizes = [8, 32], strides = [1, 1]} : vector<8x128xf32> to vector<8x32xf32>
    %121 = vector.extract_strided_slice %118 {offsets = [0, 64], sizes = [8, 32], strides = [1, 1]} : vector<8x128xf32> to vector<8x32xf32>
    %122 = vector.extract_strided_slice %118 {offsets = [0, 96], sizes = [8, 32], strides = [1, 1]} : vector<8x128xf32> to vector<8x32xf32>
    %123 = arith.mulf %120, %103 : vector<8x32xf32>
    %124 = arith.mulf %119, %121 : vector<8x32xf32>
    %125 = arith.addf %123, %124 : vector<8x32xf32>
    %126 = math.tanh %125 : vector<8x32xf32>
    %127 = arith.mulf %122, %126 : vector<8x32xf32>
    %128 = vector.extract_strided_slice %9 {offsets = [40, 0], sizes = [8, 128], strides = [1, 1]} : vector<48x128xf32> to vector<8x128xf32>
    %129 = arith.truncf %127 : vector<8x32xf32> to vector<8x32xbf16>
    %cst_29 = arith.constant dense<0.000000e+00> : vector<8x128xf32>
    %130 = tpu.matmul %129, %1, %cst_29 {dimension_numbers = #tpu.dot_dimension_numbers<[1], [0], [0], [1], [0, 0, 1, 1], [], []>} : vector<8x32xbf16>, vector<32x128xbf16>, vector<8x128xf32> -> vector<8x128xf32>
    %131 = arith.addf %128, %130 : vector<8x128xf32>
    %cst_30 = arith.constant 5.000000e-01 : f32
    %132 = vector.broadcast %cst_30 : f32 to vector<8x128xf32>
    %133 = arith.mulf %132, %131 : vector<8x128xf32>
    %134 = arith.select %15, %131, %133 : vector<8x128xi1>, vector<8x128xf32>
    %135 = math.tanh %134 : vector<8x128xf32>
    %cst_31 = arith.constant 5.000000e-01 : f32
    %136 = vector.broadcast %cst_31 : f32 to vector<8x128xf32>
    %137 = arith.mulf %136, %135 : vector<8x128xf32>
    %cst_32 = arith.constant 5.000000e-01 : f32
    %138 = vector.broadcast %cst_32 : f32 to vector<8x128xf32>
    %139 = arith.addf %137, %138 : vector<8x128xf32>
    %140 = arith.select %15, %135, %139 : vector<8x128xi1>, vector<8x128xf32>
    %141 = vector.extract_strided_slice %140 {offsets = [0, 0], sizes = [8, 32], strides = [1, 1]} : vector<8x128xf32> to vector<8x32xf32>
    %142 = vector.extract_strided_slice %140 {offsets = [0, 32], sizes = [8, 32], strides = [1, 1]} : vector<8x128xf32> to vector<8x32xf32>
    %143 = vector.extract_strided_slice %140 {offsets = [0, 64], sizes = [8, 32], strides = [1, 1]} : vector<8x128xf32> to vector<8x32xf32>
    %144 = vector.extract_strided_slice %140 {offsets = [0, 96], sizes = [8, 32], strides = [1, 1]} : vector<8x128xf32> to vector<8x32xf32>
    %145 = arith.mulf %142, %125 : vector<8x32xf32>
    %146 = arith.mulf %141, %143 : vector<8x32xf32>
    %147 = arith.addf %145, %146 : vector<8x32xf32>
    %148 = math.tanh %147 : vector<8x32xf32>
    %149 = arith.mulf %144, %148 : vector<8x32xf32>
    %150 = vector.broadcast %4 : vector<1x32xf32> to vector<8x32xf32>
    %151 = arith.mulf %149, %150 : vector<8x32xf32>
    %cst_33 = arith.constant dense<0.000000e+00> : vector<8xf32>
    %152 = vector.multi_reduction <add>, %151, %cst_33 [1] : vector<8x32xf32> to vector<8xf32>
    %153 = vector.shape_cast %152 : vector<8xf32> to vector<8x1xf32>
    %154 = vector.broadcast %5 : vector<1x1xf32> to vector<8x1xf32>
    %155 = arith.addf %153, %154 : vector<8x1xf32>
    %c0_34 = arith.constant 0 : index
    %c0_35 = arith.constant 0 : index
    %156 = vector.load %arg3[%c0_34, %c0_35] : memref<8x1xf32, #tpu.memory_space<vmem>>, vector<8x1xf32>
    tpu.vector_store %arg3[%c0_34, %c0_35], %155 {strides = array<i32>} : memref<8x1xf32, #tpu.memory_space<vmem>>, vector<8x1xf32>,
    return
  }
}

</mosaic_0001>

<llo_original>
// kernel: sample_lstm_forward.1
$region0: #{sample_lstm_forward.1}
  #allocation0 [shape = 'u32[]', space=smem, size = 0x4, offset = 0x4, fixed_abs, tag = 'smem constant byte address 0x4 - core index']
  #allocation1 [shape = 'u32[144,128]{1,0:T(1,128)}', space=vmem, size = 0x12000, scoped, tag = 'internal scratch']
  %s0 = inlined_call_operand.vmem [shape: bf16[48,8], index: 0, kind: input, shape index: {}]
  %s1 = inlined_call_operand.vmem [shape: bf16[40,128], index: 1, kind: input, shape index: {}]
  %s2 = inlined_call_operand.vmem [shape: f32[3,128], index: 2, kind: input, shape index: {}]
  %s3 = inlined_call_operand.vmem [shape: f32[8,1], index: 3, kind: output, shape index: {}]
  %s4 = sld [smem:[#allocation0]]
  $region22: #{sample_lstm_forward.1} parent=0
    _
  %s6 = ssub.s32 1, %s4
  %s7 = scalar_select 0, %s6, %s4
  // Predicated region
  $region2: #{sample_lstm_forward.1} parent=0 // pred_check
    _
  $region3: #{sample_lstm_forward.1} parent=0 // pred_check_branch
    %9 = sbr.rel (0) target = $region5
  $region4: #{sample_lstm_forward.1} parent=0 // pred_region
    _
  $region5: #{sample_lstm_forward.1} parent=0 // pred_fallthru
    _
  // Predicated region
  $region6: #{sample_lstm_forward.1} parent=0 // pred_check
    _
  $region7: #{sample_lstm_forward.1} parent=0 // pred_check_branch
    %11 = sbr.rel (0) target = $region9
  $region8: #{sample_lstm_forward.1} parent=0 // pred_region
    _
  $region9: #{sample_lstm_forward.1} parent=0 // pred_fallthru
    _
  // Predicated region
  $region10: #{sample_lstm_forward.1} parent=0 // pred_check
    _
  $region11: #{sample_lstm_forward.1} parent=0 // pred_check_branch
    %13 = sbr.rel (0) target = $region13
  $region12: #{sample_lstm_forward.1} parent=0 // pred_region
    _
  $region13: #{sample_lstm_forward.1} parent=0 // pred_fallthru
    _
  %v15 = vld [vmem:[%s1] sm:$0xf]
  %v16 = vld [vmem:[%s1 + $0x4] sm:$0xf]
  %v17 = vld [vmem:[%s1 + $0x8] sm:$0xf]
  %v18 = vld [vmem:[%s1 + $0xc] sm:$0xf]
  %v19 = vld [vmem:[%s1 + $0x10] sm:$0xf]
  %v20 = vld [vmem:[%s2] sm:$0x1]
  %v21 = vld [vmem:[%s2 + $0x1] sm:$0x1]
  %v22 = vld [vmem:[%s2 + $0x2] sm:$0x1]
  %v23 = vld [vmem:[%s0] sm:$0xf]
  %v24 = vld [vmem:[%s0 + $0x4] sm:$0xf]
  %v25 = vld [vmem:[%s0 + $0x8] sm:$0xf]
  %v26 = vld [vmem:[%s0 + $0xc] sm:$0xf]
  %v27 = vld [vmem:[%s0 + $0x10] sm:$0xf]
  %v28 = vld [vmem:[%s0 + $0x14] sm:$0xf]
  %v29 = vlaneseq
  %v30 = vshrl.u32 %v29, 7
  %v31 = vsub.s32 0, %v30
  %v32 = vrot.slane %v20, %v31
  %v39 = vunpack.c.l.b16 %v23
  %v40 = vunpack.c.l.b16 %v24
  %v41 = vunpack.c.l.b16 %v25
  %v42 = vunpack.c.l.b16 %v26
  %v43 = vunpack.c.l.b16 %v27
  %v44 = vunpack.c.l.b16 %v28
  %v45 = vpack.c.b16 %v40, %v39
  %v46 = vpack.c.b16 %v42, %v41
  %v47 = vpack.c.b16 %v44, %v43
  %vm48 = vcmask 64512
  %v50 = vsel %vm48, %v45, 0
  %v53 = vsel %vm48, %v46, 0
  %v56 = vsel %vm48, %v47, 0
  %vm58 = vcmask 1043456
  %v60 = vsel %vm58, %v19, 0
  %62 = vmatprep.subr.bf16.mxu0 0
  %63 = vmatpush1.bf16.msra.mxu0 0
  %64 = vmatprep.subr.bf16.mxu0 0
  %65 = vmatpush1.bf16.msra.mxu0 0
  %66 = vmatprep.subr.bf16.mxu0 0
  %67 = vmatpush1.bf16.msra.mxu0 0
  %68 = vmatprep.subr.bf16.mxu0 0
  %69 = vmatpush1.bf16.msra.mxu0 0
  %70 = vmatprep.subr.bf16.mxu0 0
  %71 = vmatpush1.bf16.msra.mxu0 0
  %72 = vmatprep.subr.bf16.mxu0 0
  %73 = vmatpush1.bf16.msra.mxu0 0
  %74 = vmatprep.subr.bf16.mxu0 0
  %75 = vmatpush1.bf16.msra.mxu0 0
  %76 = vmatprep.subr.bf16.mxu0 0
  %77 = vmatpush1.bf16.msra.mxu0 %v60
  %78 = vmatprep.subr.bf16.mxu0 0
  %79 = vmatpush2.bf16.msra.mxu0 0
  %80 = vmatprep.subr.bf16.mxu0 0
  %81 = vmatpush2.bf16.msra.mxu0 0
  %82 = vmatprep.subr.bf16.mxu0 0
  %83 = vmatpush2.bf16.msra.mxu0 0
  %84 = vmatprep.subr.bf16.mxu0 0
  %85 = vmatpush2.bf16.msra.mxu0 0
  %86 = vmatprep.subr.bf16.mxu0 0
  %87 = vmatpush2.bf16.msra.mxu0 0
  %88 = vmatprep.subr.bf16.mxu0 0
  %89 = vmatpush2.bf16.msra.mxu0 0
  %90 = vmatprep.subr.bf16.mxu0 0
  %91 = vmatpush2.bf16.msra.mxu0 0
  %92 = vmatprep.subr.bf16.mxu0 0
  %93 = vmatpush2.bf16.msra.mxu0 0
  %94 = vmatprep.mubr.bf16.mxu0 0
  %95 = vmatmul.mubr.bf16.gmra.mxu0 %v50
  %v96 = vpop.f32.mrf.mxu0
  %v97 = vadd.f32 %v32, %v96
  %v98 = vpop.f32.mrf.mxu0
  %v99 = vpop.f32.mrf.mxu0
  %v100 = vadd.f32 %v32, %v99
  %v101 = vpop.f32.mrf.mxu0
  %102 = vmatprep.mubr.bf16.mxu0 0
  %103 = vmatmul.mubr.bf16.gmra.mxu0 %v53
  %v104 = vpop.f32.mrf.mxu0
  %v105 = vadd.f32 %v32, %v104
  %v106 = vpop.f32.mrf.mxu0
  %v107 = vpop.f32.mrf.mxu0
  %v108 = vadd.f32 %v32, %v107
  %v109 = vpop.f32.mrf.mxu0
  %110 = vmatprep.mubr.bf16.mxu0 0
  %111 = vmatmul.mubr.bf16.gmra.mxu0 %v56
  %v112 = vpop.f32.mrf.mxu0
  %v113 = vadd.f32 %v32, %v112
  %v114 = vpop.f32.mrf.mxu0
  %v115 = vpop.f32.mrf.mxu0
  %v116 = vadd.f32 %v32, %v115
  %v117 = vpop.f32.mrf.mxu0
  %118 = vdwg.mxu0
  %v119 = vlaneseq
  %v120 = vand.u32 %v119, 127
  %vm121 = vcmp.ge.s32.totalorder %v120, 64
  %vm122 = vcmp.lt.s32.totalorder %v120, 96
  %vm123 = vmand %vm121, %vm122
  %v128 = vunpack.c.l.b16 %v15
  %v129 = vunpack.c.l.b16 %v16
  %v130 = vunpack.c.l.b16 %v17
  %v131 = vunpack.c.l.b16 %v18
  %v132 = vpack.c.b16 %v129, %v128
  %v133 = vpack.c.b16 %v131, %v130
  %vm136 = vcmask 261120
  %v138 = vsel %vm136, 0, 0
  %140 = vmatprep.subr.bf16.mxu0 0
  %141 = vmatpush1.bf16.msra.mxu0 0
  %142 = vmatprep.subr.bf16.mxu0 0
  %143 = vmatpush1.bf16.msra.mxu0 0
  %144 = vmatprep.subr.bf16.mxu0 0
  %145 = vmatpush1.bf16.msra.mxu0 0
  %146 = vmatprep.subr.bf16.mxu0 0
  %147 = vmatpush1.bf16.msra.mxu0 0
  %148 = vmatprep.subr.bf16.mxu0 0
  %149 = vmatpush1.bf16.msra.mxu0 0
  %150 = vmatprep.subr.bf16.mxu0 0
  %151 = vmatpush1.bf16.msra.mxu0 0
  %152 = vmatprep.subr.bf16.mxu0 0
  %153 = vmatpush1.bf16.msra.mxu0 %v133
  %154 = vmatprep.subr.bf16.mxu0 0
  %155 = vmatpush1.bf16.msra.mxu0 %v132
  %156 = vmatprep.subr.bf16.mxu0 0
  %157 = vmatpush2.bf16.msra.mxu0 0
  %158 = vmatprep.subr.bf16.mxu0 0
  %159 = vmatpush2.bf16.msra.mxu0 0
  %160 = vmatprep.subr.bf16.mxu0 0
  %161 = vmatpush2.bf16.msra.mxu0 0
  %162 = vmatprep.subr.bf16.mxu0 0
  %163 = vmatpush2.bf16.msra.mxu0 0
  %164 = vmatprep.subr.bf16.mxu0 0
  %165 = vmatpush2.bf16.msra.mxu0 0
  %166 = vmatprep.subr.bf16.mxu0 0
  %167 = vmatpush2.bf16.msra.mxu0 0
  %168 = vmatprep.subr.bf16.mxu0 0
  %169 = vmatpush2.bf16.msra.mxu0 0
  %170 = vmatprep.subr.bf16.mxu0 0
  %171 = vmatpush2.bf16.msra.mxu0 0
  %172 = vmatprep.mubr.bf16.mxu0 0
  %173 = vmatmul.mubr.bf16.gmra.mxu0 %v138
  %v174 = vpop.f32.mrf.mxu0
  %v175 = vadd.f32 0.0, %v174
  %v176 = vpop.f32.mrf.mxu0
  %v177 = vpop.f32.mrf.mxu0
  %v178 = vpop.f32.mrf.mxu0
  %179 = vdwg.mxu0
  %v180 = vadd.f32 %v97, %v175
  %v181 = vmul.f32 %v180, 0.5
  %v182 = vsel %vm123, %v180, %v181
  %v183 = vtanh.pop %v182
  %v184 = vmul.f32 %v183, 0.5
  %v185 = vadd.f32 %v184, 0.5
  %v186 = vsel %vm123, %v183, %v185
  %v187 = vmul.f32 %v186, 0.0
  %189 = vrot.lane.b32.xlu0 %v186, 64
  %v190 = vpop.permute.xlu0 %189
  %v192 = vmul.f32 %v186, %v190
  %194 = vrot.lane.b32.xlu0 %v192, 32
  %v195 = vpop.permute.xlu0 %194
  %v197 = vadd.f32 %v187, %v195
  %v198 = vtanh.pop %v197
  %200 = vrot.lane.b32.xlu0 %v198, 64
  %v201 = vpop.permute.xlu0 %200
  %v203 = vmul.f32 %v186, %v201
  %v204 = vpack.c.bf16 %v203, %v203
  %206 = vrot.lane.b32.xlu0 %v204, 32
  %v207 = vpop.permute.xlu0 %206
  %v209 = vsel %vm136, %v207, 0
  %211 = vmatprep.subr.bf16.mxu0 0
  %212 = vmatpush1.bf16.msra.mxu0 0
  %213 = vmatprep.subr.bf16.mxu0 0
  %214 = vmatpush1.bf16.msra.mxu0 0
  %215 = vmatprep.subr.bf16.mxu0 0
  %216 = vmatpush1.bf16.msra.mxu0 0
  %217 = vmatprep.subr.bf16.mxu0 0
  %218 = vmatpush1.bf16.msra.mxu0 0
  %219 = vmatprep.subr.bf16.mxu0 0
  %220 = vmatpush1.bf16.msra.mxu0 0
  %221 = vmatprep.subr.bf16.mxu0 0
  %222 = vmatpush1.bf16.msra.mxu0 0
  %223 = vmatprep.subr.bf16.mxu0 0
  %224 = vmatpush1.bf16.msra.mxu0 %v133
  %225 = vmatprep.subr.bf16.mxu0 0
  %226 = vmatpush1.bf16.msra.mxu0 %v132
  %227 = vmatprep.subr.bf16.mxu0 0
  %228 = vmatpush2.bf16.msra.mxu0 0
  %229 = vmatprep.subr.bf16.mxu0 0
  %230 = vmatpush2.bf16.msra.mxu0 0
  %231 = vmatprep.subr.bf16.mxu0 0
  %232 = vmatpush2.bf16.msra.mxu0 0
  %233 = vmatprep.subr.bf16.mxu0 0
  %234 = vmatpush2.bf16.msra.mxu0 0
  %235 = vmatprep.subr.bf16.mxu0 0
  %236 = vmatpush2.bf16.msra.mxu0 0
  %237 = vmatprep.subr.bf16.mxu0 0
  %238 = vmatpush2.bf16.msra.mxu0 0
  %239 = vmatprep.subr.bf16.mxu0 0
  %240 = vmatpush2.bf16.msra.mxu0 0
  %241 = vmatprep.subr.bf16.mxu0 0
  %242 = vmatpush2.bf16.msra.mxu0 0
  %243 = vmatprep.mubr.bf16.mxu0 0
  %244 = vmatmul.mubr.bf16.gmra.mxu0 %v209
  %v245 = vpop.f32.mrf.mxu0
  %v246 = vadd.f32 0.0, %v245
  %v247 = vpop.f32.mrf.mxu0
  %v248 = vpop.f32.mrf.mxu0
  %v249 = vpop.f32.mrf.mxu0
  %250 = vdwg.mxu0
  %v251 = vadd.f32 %v100, %v246
  %v252 = vmul.f32 %v251, 0.5
  %v253 = vsel %vm123, %v251, %v252
  %v254 = vtanh.pop %v253
  %v255 = vmul.f32 %v254, 0.5
  %v256 = vadd.f32 %v255, 0.5
  %v257 = vsel %vm123, %v254, %v256
  %v258 = vmul.f32 %v257, %v197
  %260 = vrot.lane.b32.xlu0 %v257, 64
  %v261 = vpop.permute.xlu0 %260
  %v263 = vmul.f32 %v257, %v261
  %265 = vrot.lane.b32.xlu0 %v263, 32
  %v266 = vpop.permute.xlu0 %265
  %v268 = vadd.f32 %v258, %v266
  %v269 = vtanh.pop %v268
  %271 = vrot.lane.b32.xlu0 %v269, 64
  %v272 = vpop.permute.xlu0 %271
  %v274 = vmul.f32 %v257, %v272
  %v275 = vpack.c.bf16 %v274, %v274
  %277 = vrot.lane.b32.xlu0 %v275, 32
  %v278 = vpop.permute.xlu0 %277
  %v280 = vsel %vm136, %v278, 0
  %282 = vmatprep.subr.bf16.mxu0 0
  %283 = vmatpush1.bf16.msra.mxu0 0
  %284 = vmatprep.subr.bf16.mxu0 0
  %285 = vmatpush1.bf16.msra.mxu0 0
  %286 = vmatprep.subr.bf16.mxu0 0
  %287 = vmatpush1.bf16.msra.mxu0 0
  %288 = vmatprep.subr.bf16.mxu0 0
  %289 = vmatpush1.bf16.msra.mxu0 0
  %290 = vmatprep.subr.bf16.mxu0 0
  %291 = vmatpush1.bf16.msra.mxu0 0
  %292 = vmatprep.subr.bf16.mxu0 0
  %293 = vmatpush1.bf16.msra.mxu0 0
  %294 = vmatprep.subr.bf16.mxu0 0
  %295 = vmatpush1.bf16.msra.mxu0 %v133
  %296 = vmatprep.subr.bf16.mxu0 0
  %297 = vmatpush1.bf16.msra.mxu0 %v132
  %298 = vmatprep.subr.bf16.mxu0 0
  %299 = vmatpush2.bf16.msra.mxu0 0
  %300 = vmatprep.subr.bf16.mxu0 0
  %301 = vmatpush2.bf16.msra.mxu0 0
  %302 = vmatprep.subr.bf16.mxu0 0
  %303 = vmatpush2.bf16.msra.mxu0 0
  %304 = vmatprep.subr.bf16.mxu0 0
  %305 = vmatpush2.bf16.msra.mxu0 0
  %306 = vmatprep.subr.bf16.mxu0 0
  %307 = vmatpush2.bf16.msra.mxu0 0
  %308 = vmatprep.subr.bf16.mxu0 0
  %309 = vmatpush2.bf16.msra.mxu0 0
  %310 = vmatprep.subr.bf16.mxu0 0
  %311 = vmatpush2.bf16.msra.mxu0 0
  %312 = vmatprep.subr.bf16.mxu0 0
  %313 = vmatpush2.bf16.msra.mxu0 0
  %314 = vmatprep.mubr.bf16.mxu0 0
  %315 = vmatmul.mubr.bf16.gmra.mxu0 %v280
  %v316 = vpop.f32.mrf.mxu0
  %v317 = vadd.f32 0.0, %v316
  %v318 = vpop.f32.mrf.mxu0
  %v319 = vpop.f32.mrf.mxu0
  %v320 = vpop.f32.mrf.mxu0
  %321 = vdwg.mxu0
  %v322 = vadd.f32 %v105, %v317
  %v323 = vmul.f32 %v322, 0.5
  %v324 = vsel %vm123, %v322, %v323
  %v325 = vtanh.pop %v324
  %v326 = vmul.f32 %v325, 0.5
  %v327 = vadd.f32 %v326, 0.5
  %v328 = vsel %vm123, %v325, %v327
  %v329 = vmul.f32 %v328, %v268
  %331 = vrot.lane.b32.xlu0 %v328, 64
  %v332 = vpop.permute.xlu0 %331
  %v334 = vmul.f32 %v328, %v332
  %336 = vrot.lane.b32.xlu0 %v334, 32
  %v337 = vpop.permute.xlu0 %336
  %v339 = vadd.f32 %v329, %v337
  %v340 = vtanh.pop %v339
  %342 = vrot.lane.b32.xlu0 %v340, 64
  %v343 = vpop.permute.xlu0 %342
  %v345 = vmul.f32 %v328, %v343
  %v346 = vpack.c.bf16 %v345, %v345
  %348 = vrot.lane.b32.xlu0 %v346, 32
  %v349 = vpop.permute.xlu0 %348
  %v351 = vsel %vm136, %v349, 0
  %353 = vmatprep.subr.bf16.mxu0 0
  %354 = vmatpush1.bf16.msra.mxu0 0
  %355 = vmatprep.subr.bf16.mxu0 0
  %356 = vmatpush1.bf16.msra.mxu0 0
  %357 = vmatprep.subr.bf16.mxu0 0
  %358 = vmatpush1.bf16.msra.mxu0 0
  %359 = vmatprep.subr.bf16.mxu0 0
  %360 = vmatpush1.bf16.msra.mxu0 0
  %361 = vmatprep.subr.bf16.mxu0 0
  %362 = vmatpush1.bf16.msra.mxu0 0
  %363 = vmatprep.subr.bf16.mxu0 0
  %364 = vmatpush1.bf16.msra.mxu0 0
  %365 = vmatprep.subr.bf16.mxu0 0
  %366 = vmatpush1.bf16.msra.mxu0 %v133
  %367 = vmatprep.subr.bf16.mxu0 0
  %368 = vmatpush1.bf16.msra.mxu0 %v132
  %369 = vmatprep.subr.bf16.mxu0 0
  %370 = vmatpush2.bf16.msra.mxu0 0
  %371 = vmatprep.subr.bf16.mxu0 0
  %372 = vmatpush2.bf16.msra.mxu0 0
  %373 = vmatprep.subr.bf16.mxu0 0
  %374 = vmatpush2.bf16.msra.mxu0 0
  %375 = vmatprep.subr.bf16.mxu0 0
  %376 = vmatpush2.bf16.msra.mxu0 0
  %377 = vmatprep.subr.bf16.mxu0 0
  %378 = vmatpush2.bf16.msra.mxu0 0
  %379 = vmatprep.subr.bf16.mxu0 0
  %380 = vmatpush2.bf16.msra.mxu0 0
  %381 = vmatprep.subr.bf16.mxu0 0
  %382 = vmatpush2.bf16.msra.mxu0 0
  %383 = vmatprep.subr.bf16.mxu0 0
  %384 = vmatpush2.bf16.msra.mxu0 0
  %385 = vmatprep.mubr.bf16.mxu0 0
  %386 = vmatmul.mubr.bf16.gmra.mxu0 %v351
  %v387 = vpop.f32.mrf.mxu0
  %v388 = vadd.f32 0.0, %v387
  %v389 = vpop.f32.mrf.mxu0
  %v390 = vpop.f32.mrf.mxu0
  %v391 = vpop.f32.mrf.mxu0
  %392 = vdwg.mxu0
  %v393 = vadd.f32 %v108, %v388
  %v394 = vmul.f32 %v393, 0.5
  %v395 = vsel %vm123, %v393, %v394
  %v396 = vtanh.pop %v395
  %v397 = vmul.f32 %v396, 0.5
  %v398 = vadd.f32 %v397, 0.5
  %v399 = vsel %vm123, %v396, %v398
  %v400 = vmul.f32 %v399, %v339
  %402 = vrot.lane.b32.xlu0 %v399, 64
  %v403 = vpop.permute.xlu0 %402
  %v405 = vmul.f32 %v399, %v403
  %407 = vrot.lane.b32.xlu0 %v405, 32
  %v408 = vpop.permute.xlu0 %407
  %v410 = vadd.f32 %v400, %v408
  %v411 = vtanh.pop %v410
  %413 = vrot.lane.b32.xlu0 %v411, 64
  %v414 = vpop.permute.xlu0 %413
  %v416 = vmul.f32 %v399, %v414
  %v417 = vpack.c.bf16 %v416, %v416
  %419 = vrot.lane.b32.xlu0 %v417, 32
  %v420 = vpop.permute.xlu0 %419
  %v422 = vsel %vm136, %v420, 0
  %424 = vmatprep.subr.bf16.mxu0 0
  %425 = vmatpush1.bf16.msra.mxu0 0
  %426 = vmatprep.subr.bf16.mxu0 0
  %427 = vmatpush1.bf16.msra.mxu0 0
  %428 = vmatprep.subr.bf16.mxu0 0
  %429 = vmatpush1.bf16.msra.mxu0 0
  %430 = vmatprep.subr.bf16.mxu0 0
  %431 = vmatpush1.bf16.msra.mxu0 0
  %432 = vmatprep.subr.bf16.mxu0 0
  %433 = vmatpush1.bf16.msra.mxu0 0
  %434 = vmatprep.subr.bf16.mxu0 0
  %435 = vmatpush1.bf16.msra.mxu0 0
  %436 = vmatprep.subr.bf16.mxu0 0
  %437 = vmatpush1.bf16.msra.mxu0 %v133
  %438 = vmatprep.subr.bf16.mxu0 0
  %439 = vmatpush1.bf16.msra.mxu0 %v132
  %440 = vmatprep.subr.bf16.mxu0 0
  %441 = vmatpush2.bf16.msra.mxu0 0
  %442 = vmatprep.subr.bf16.mxu0 0
  %443 = vmatpush2.bf16.msra.mxu0 0
  %444 = vmatprep.subr.bf16.mxu0 0
  %445 = vmatpush2.bf16.msra.mxu0 0
  %446 = vmatprep.subr.bf16.mxu0 0
  %447 = vmatpush2.bf16.msra.mxu0 0
  %448 = vmatprep.subr.bf16.mxu0 0
  %449 = vmatpush2.bf16.msra.mxu0 0
  %450 = vmatprep.subr.bf16.mxu0 0
  %451 = vmatpush2.bf16.msra.mxu0 0
  %452 = vmatprep.subr.bf16.mxu0 0
  %453 = vmatpush2.bf16.msra.mxu0 0
  %454 = vmatprep.subr.bf16.mxu0 0
  %455 = vmatpush2.bf16.msra.mxu0 0
  %456 = vmatprep.mubr.bf16.mxu0 0
  %457 = vmatmul.mubr.bf16.gmra.mxu0 %v422
  %v458 = vpop.f32.mrf.mxu0
  %v459 = vadd.f32 0.0, %v458
  %v460 = vpop.f32.mrf.mxu0
  %v461 = vpop.f32.mrf.mxu0
  %v462 = vpop.f32.mrf.mxu0
  %463 = vdwg.mxu0
  %v464 = vadd.f32 %v113, %v459
  %v465 = vmul.f32 %v464, 0.5
  %v466 = vsel %vm123, %v464, %v465
  %v467 = vtanh.pop %v466
  %v468 = vmul.f32 %v467, 0.5
  %v469 = vadd.f32 %v468, 0.5
  %v470 = vsel %vm123, %v467, %v469
  %v471 = vmul.f32 %v470, %v410
  %473 = vrot.lane.b32.xlu0 %v470, 64
  %v474 = vpop.permute.xlu0 %473
  %v476 = vmul.f32 %v470, %v474
  %478 = vrot.lane.b32.xlu0 %v476, 32
  %v479 = vpop.permute.xlu0 %478
  %v481 = vadd.f32 %v471, %v479
  %v482 = vtanh.pop %v481
  %484 = vrot.lane.b32.xlu0 %v482, 64
  %v485 = vpop.permute.xlu0 %484
  %v487 = vmul.f32 %v470, %v485
  %v488 = vpack.c.bf16 %v487, %v487
  %490 = vrot.lane.b32.xlu0 %v488, 32
  %v491 = vpop.permute.xlu0 %490
  %v493 = vsel %vm136, %v491, 0
  %495 = vmatprep.subr.bf16.mxu0 0
  %496 = vmatpush1.bf16.msra.mxu0 0
  %497 = vmatprep.subr.bf16.mxu0 0
  %498 = vmatpush1.bf16.msra.mxu0 0
  %499 = vmatprep.subr.bf16.mxu0 0
  %500 = vmatpush1.bf16.msra.mxu0 0
  %501 = vmatprep.subr.bf16.mxu0 0
  %502 = vmatpush1.bf16.msra.mxu0 0
  %503 = vmatprep.subr.bf16.mxu0 0
  %504 = vmatpush1.bf16.msra.mxu0 0
  %505 = vmatprep.subr.bf16.mxu0 0
  %506 = vmatpush1.bf16.msra.mxu0 0
  %507 = vmatprep.subr.bf16.mxu0 0
  %508 = vmatpush1.bf16.msra.mxu0 %v133
  %509 = vmatprep.subr.bf16.mxu0 0
  %510 = vmatpush1.bf16.msra.mxu0 %v132
  %511 = vmatprep.subr.bf16.mxu0 0
  %512 = vmatpush2.bf16.msra.mxu0 0
  %513 = vmatprep.subr.bf16.mxu0 0
  %514 = vmatpush2.bf16.msra.mxu0 0
  %515 = vmatprep.subr.bf16.mxu0 0
  %516 = vmatpush2.bf16.msra.mxu0 0
  %517 = vmatprep.subr.bf16.mxu0 0
  %518 = vmatpush2.bf16.msra.mxu0 0
  %519 = vmatprep.subr.bf16.mxu0 0
  %520 = vmatpush2.bf16.msra.mxu0 0
  %521 = vmatprep.subr.bf16.mxu0 0
  %522 = vmatpush2.bf16.msra.mxu0 0
  %523 = vmatprep.subr.bf16.mxu0 0
  %524 = vmatpush2.bf16.msra.mxu0 0
  %525 = vmatprep.subr.bf16.mxu0 0
  %526 = vmatpush2.bf16.msra.mxu0 0
  %527 = vmatprep.mubr.bf16.mxu0 0
  %528 = vmatmul.mubr.bf16.gmra.mxu0 %v493
  %v529 = vpop.f32.mrf.mxu0
  %v530 = vadd.f32 0.0, %v529
  %v531 = vpop.f32.mrf.mxu0
  %v532 = vpop.f32.mrf.mxu0
  %v533 = vpop.f32.mrf.mxu0
  %534 = vdwg.mxu0
  %v535 = vadd.f32 %v116, %v530
  %v536 = vmul.f32 %v535, 0.5
  %v537 = vsel %vm123, %v535, %v536
  %v538 = vtanh.pop %v537
  %v539 = vmul.f32 %v538, 0.5
  %v540 = vadd.f32 %v539, 0.5
  %v541 = vsel %vm123, %v538, %v540
  %v542 = vmul.f32 %v541, %v481
  %544 = vrot.lane.b32.xlu0 %v541, 64
  %v545 = vpop.permute.xlu0 %544
  %v547 = vmul.f32 %v541, %v545
  %549 = vrot.lane.b32.xlu0 %v547, 32
  %v550 = vpop.permute.xlu0 %549
  %v552 = vadd.f32 %v542, %v550
  %v553 = vtanh.pop %v552
  %555 = vrot.lane.b32.xlu0 %v553, 64
  %v556 = vpop.permute.xlu0 %555
  %v558 = vmul.f32 %v541, %v556
  %v559 = vlaneseq
  %v560 = vshrl.u32 %v559, 7
  %v561 = vsub.s32 0, %v560
  %v562 = vrot.slane %v21, %v561
  %564 = vrot.lane.b32.xlu0 %v562, 96
  %v565 = vpop.permute.xlu0 %564
  %v567 = vmul.f32 %v558, %v565
  %569 = vrot.lane.b32.xlu0 %v567, 32
  %v570 = vpop.permute.xlu0 %569
  %v572 = vsel %vm136, %v570, 0.0
  %573 = vadd.xlane.f32.xlu0 %v572
  %v574 = vpop.xlane.xlu0 %573
  %v575 = vlaneseq
  %v576 = vshrl.u32 %v575, 7
  %v577 = vsub.s32 0, %v576
  %v578 = vrot.slane %v22, %v577
  %v579 = vadd.f32 %v574, %v578
  %vm580 = vcmask 7168
  %581 = vst.msk [vmem:[%s3] sm:$0xff] %vm580, %v579
  // Predicated region
  $region14: #{sample_lstm_forward.1} parent=0 // pred_check
    _
  $region15: #{sample_lstm_forward.1} parent=0 // pred_check_branch
    %583 = sbr.rel (0) target = $region17
  $region16: #{sample_lstm_forward.1} parent=0 // pred_region
    _
  $region17: #{sample_lstm_forward.1} parent=0 // pred_fallthru
    _
  // Predicated region
  $region18: #{sample_lstm_forward.1} parent=0 // pred_check
    _
  $region19: #{sample_lstm_forward.1} parent=0 // pred_check_branch
    %585 = sbr.rel (0) target = $region21
  $region20: #{sample_lstm_forward.1} parent=0 // pred_region
    _
  $region21: #{sample_lstm_forward.1} parent=0 // pred_fallthru
    _

</llo_original>
